<compile_context>
chip_gen: v6e
topology: v6e:2x2x1
jax: 0.10.0
libtpu: 0.0.40
codegen_flags: <defaults>
</compile_context>

<pallas_src>
import functools

import jax
import jax.numpy as jnp
from jax.experimental import pallas as pl
from jax.experimental.pallas import tpu as pltpu


def _layernorm_kernel(x_ref, g_ref, b_ref, o_ref, *, eps, n_feat):
    # x_ref: (TB, C*H*W) lane-dense block holding TB full samples.
    x = x_ref[...]
    if x.dtype != jnp.float32:
        x = x.astype(jnp.float32)  # do the math in f32 for sub-32-bit inputs

    # Per-sample (per-row) statistics; two-pass variance for robustness.
    mean = jnp.sum(x, axis=-1, keepdims=True) * (1.0 / n_feat)
    xc = x - mean
    var = jnp.sum(xc * xc, axis=-1, keepdims=True) * (1.0 / (n_feat - 1))
    # Matches the PyTorch module: unbiased std, eps added to std (NOT under sqrt).
    inv = pl.reciprocal(jnp.sqrt(var) + eps)  # (TB, 1) — no full-tile divide

    # Affine params are pre-expanded to (1, C*H*W): plain vreg multiply/add.
    # TODO(synk): replace the implicit sublane broadcast with stride-0 loads
    # (g_ref[pl.ds(0, tb, stride=0), :]) once verified on the target jax build.
    y = (xc * inv) * g_ref[...] + b_ref[...]
    o_ref[...] = y.astype(o_ref.dtype)


def _choose_block_rows(n, chw, in_itemsize):
    """Rows per block.

    VMEM accounting per block: 2x double-buffered input copies + 2x output
    copies at the input dtype, plus ~2 block-sized f32 temporaries (f32 cast /
    centered x / y) in Mosaic internal scratch.  The 16 MiB budget keeps blocks
    comfortably inside v7x's 64 MiB VMEM (and the 48 MiB limit set below).

    Prefers a row count that divides n exactly (no host-side pad/slice pass)
    and yields >= ~8 grid steps for DMA/compute overlap and v7x dual-TC load
    balance, while keeping each block >= ~1 MiB so per-step overhead stays
    amortized.
    """
    per_row_bytes = (4 * in_itemsize + 2 * 4) * chw
    budget_bytes = 16 * 1024 * 1024
    max_rows = budget_bytes // per_row_bytes
    if max_rows < 1:
        # TODO(synk): a single sample exceeds the per-block budget (C*H*W in the
        # ~700K+ range); needs a feature-chunked two-pass scheme.  Clamp to one
        # row and rely on the raised vmem limit.
        return 1

    if n <= 8:
        # Tiny batch: one block (block rows == full array dim satisfies the
        # (8,128) tiling rule), but never exceed the VMEM row cap.
        return min(n, max_rows)

    # Keep each block >= ~1 MiB of input data (multiple of 8 rows).
    min_rows = -(-(1024 * 1024) // (chw * in_itemsize))  # ceil div
    min_rows = max(8, ((min_rows + 7) // 8) * 8)
    # Aim for ~8 grid steps when the batch is big enough.
    pref = max(min_rows, n // 8)
    pref = min(pref, max_rows, n)
    pref = max(8, (pref // 8) * 8)

    # Largest multiple of 8 <= pref that divides n -> no pad, no tail slice.
    tb = pref
    while tb >= 8:
        if n % tb == 0:
            return tb
        tb -= 8

    # No multiple-of-8 divisor of n: take the whole batch in one block if it
    # fits, otherwise the caller pads the tail (rare: n not a multiple of 8
    # and too large for a single block).
    if n <= max_rows:
        return n
    return max(8, (max_rows // 8) * 8) if max_rows >= 8 else max_rows


def layer_norm(x, gamma, beta, eps=1e-5):
    """Per-sample LayerNorm over all non-batch dims, with per-channel affine.

    x: (N, C, H, W); gamma, beta: (C,)
    """
    N, C, H, W = x.shape
    HW = H * W
    CHW = C * HW

    x2 = x.reshape(N, CHW)
    # Pre-expand per-channel affine params to a lane-dense (1, C*H*W) vector.
    # TODO(synk): cache/constant-fold these expansions across calls; for very
    # small batches the extra 2*CHW of HBM traffic is measurable.
    g2 = jnp.repeat(gamma.astype(jnp.float32), HW).reshape(1, CHW)
    b2 = jnp.repeat(beta.astype(jnp.float32), HW).reshape(1, CHW)

    itemsize = jnp.dtype(x.dtype).itemsize
    tb = _choose_block_rows(N, CHW, itemsize)

    n_rows = N
    if N % tb != 0:
        # Rare fallback path only (costs one extra HBM pass over the tensor).
        n_rows = pl.cdiv(N, tb) * tb
        x2 = jnp.pad(x2, ((0, n_rows - N), (0, 0)))
    grid = (n_rows // tb,)

    kernel = functools.partial(_layernorm_kernel, eps=eps, n_feat=CHW)

    cost = pl.CostEstimate(
        flops=8 * n_rows * CHW,
        transcendentals=2 * n_rows,
        bytes_accessed=(2 * n_rows * CHW + 2 * CHW) * itemsize,
    )

    out2 = pl.pallas_call(
        kernel,
        out_shape=jax.ShapeDtypeStruct((n_rows, CHW), x.dtype),
        grid=grid,
        in_specs=[
            pl.BlockSpec((tb, CHW), lambda i: (i, 0)),
            pl.BlockSpec((1, CHW), lambda i: (0, 0)),  # gamma: resident in VMEM
            pl.BlockSpec((1, CHW), lambda i: (0, 0)),  # beta:  resident in VMEM
        ],
        out_specs=pl.BlockSpec((tb, CHW), lambda i: (i, 0)),
        compiler_params=pltpu.CompilerParams(
            dimension_semantics=("parallel",),
            vmem_limit_bytes=48 * 1024 * 1024,
        ),
        cost_estimate=cost,
    )(x2, g2, b2)

    if n_rows != N:
        out2 = out2[:N]
    return out2.reshape(N, C, H, W)


def layer_norm_ref(x, gamma, beta, eps=1e-5):
    """Pure-JAX reference matching the PyTorch module (float32 path)."""
    N = x.shape[0]
    xf = x.reshape(N, -1)
    mean = xf.mean(axis=1).reshape(N, 1, 1, 1)
    std = jnp.sqrt(
        jnp.sum((xf - xf.mean(axis=1, keepdims=True)) ** 2, axis=1)
        / (xf.shape[1] - 1)
    ).reshape(N, 1, 1, 1)
    y = (x - mean) / (std + eps)
    y = y * gamma.reshape(1, -1, 1, 1) + beta.reshape(1, -1, 1, 1)
    return y


if __name__ == "__main__":
    key = jax.random.PRNGKey(0)
    kx, kg = jax.random.split(key)

    N, C, H, W = 2, 4, 16, 16
    x = jax.random.normal(kx, (N, C, H, W), dtype=jnp.float32)

    # Deterministic parameter init matching nn.Parameter(...).uniform_() / zeros
    gamma = jax.random.uniform(kg, (C,), dtype=jnp.float32)
    beta = jnp.zeros((C,), dtype=jnp.float32)

    out = layer_norm(x, gamma, beta, eps=1e-5)
    out = jax.block_until_ready(out)

    ref = layer_norm_ref(x, gamma, beta, eps=1e-5)
    assert out.shape == (N, C, H, W)
    assert jnp.allclose(out, ref, atol=1e-5, rtol=1e-5), "mismatch vs reference"

    # TODO(synk): the torch.cuda.HalfTensor branch (global mean/std over the
    # whole flattened tensor in fp16) is not reproduced; only the standard
    # per-sample float path is implemented.
    print("KERNEL_OK")
</pallas_src>

<mosaic_0001>
module attributes {stable_mosaic.version = 11 : i64} {
  func.func @_layernorm_kernel(%arg0: i32, %arg1: memref<2x1024xf32, #tpu.memory_space<vmem>>, %arg2: memref<1x1024xf32, #tpu.memory_space<vmem>>, %arg3: memref<1x1024xf32, #tpu.memory_space<vmem>>, %arg4: memref<2x1024xf32, #tpu.memory_space<vmem>>) attributes {dimension_semantics = [#tpu.dimension_semantics<parallel>], iteration_bounds = array<i64: 1>, scalar_prefetch = 0 : i64, scratch_operands = 0 : i64, tpu.core_type = #tpu.core_type<tc>, window_params = [{transform_indices = @transform_0, window_bounds = array<i64: 2, 1024>}, {pipeline_mode = #tpu.pipeline_mode<synchronous>, transform_indices = @transform_1, window_bounds = array<i64: 1, 1024>}, {pipeline_mode = #tpu.pipeline_mode<synchronous>, transform_indices = @transform_2, window_bounds = array<i64: 1, 1024>}, {transform_indices = @transform_3, window_bounds = array<i64: 2, 1024>}]} {
    %c0 = arith.constant 0 : index
    %c0_0 = arith.constant 0 : index
    %0 = vector.load %arg1[%c0, %c0_0] : memref<2x1024xf32, #tpu.memory_space<vmem>>, vector<2x1024xf32>
    %cst = arith.constant dense<0.000000e+00> : vector<2xf32>
    %1 = vector.multi_reduction <add>, %0, %cst [1] : vector<2x1024xf32> to vector<2xf32>
    %2 = vector.shape_cast %1 : vector<2xf32> to vector<2x1xf32>
    %cst_1 = arith.constant 9.765625E-4 : f32
    %3 = vector.broadcast %cst_1 : f32 to vector<2x1xf32>
    %4 = arith.mulf %2, %3 : vector<2x1xf32>
    %5 = vector.broadcast %4 : vector<2x1xf32> to vector<2x1024xf32>
    %6 = arith.subf %0, %5 : vector<2x1024xf32>
    %7 = arith.mulf %6, %6 : vector<2x1024xf32>
    %cst_2 = arith.constant dense<0.000000e+00> : vector<2xf32>
    %8 = vector.multi_reduction <add>, %7, %cst_2 [1] : vector<2x1024xf32> to vector<2xf32>
    %9 = vector.shape_cast %8 : vector<2xf32> to vector<2x1xf32>
    %cst_3 = arith.constant 9.77517105E-4 : f32
    %10 = vector.broadcast %cst_3 : f32 to vector<2x1xf32>
    %11 = arith.mulf %9, %10 : vector<2x1xf32>
    %12 = math.sqrt %11 : vector<2x1xf32>
    %cst_4 = arith.constant 9.99999974E-6 : f32
    %13 = vector.broadcast %cst_4 : f32 to vector<2x1xf32>
    %14 = arith.addf %12, %13 : vector<2x1xf32>
    %15 = tpu.reciprocal %14 : vector<2x1xf32> -> vector<2x1xf32>
    %16 = vector.broadcast %15 : vector<2x1xf32> to vector<2x1024xf32>
    %17 = arith.mulf %6, %16 : vector<2x1024xf32>
    %c0_5 = arith.constant 0 : index
    %c0_6 = arith.constant 0 : index
    %18 = vector.load %arg2[%c0_5, %c0_6] : memref<1x1024xf32, #tpu.memory_space<vmem>>, vector<1x1024xf32>
    %19 = vector.broadcast %18 : vector<1x1024xf32> to vector<2x1024xf32>
    %20 = arith.mulf %17, %19 : vector<2x1024xf32>
    %c0_7 = arith.constant 0 : index
    %c0_8 = arith.constant 0 : index
    %21 = vector.load %arg3[%c0_7, %c0_8] : memref<1x1024xf32, #tpu.memory_space<vmem>>, vector<1x1024xf32>
    %22 = vector.broadcast %21 : vector<1x1024xf32> to vector<2x1024xf32>
    %23 = arith.addf %20, %22 : vector<2x1024xf32>
    %c0_9 = arith.constant 0 : index
    %c0_10 = arith.constant 0 : index
    %24 = vector.load %arg4[%c0_9, %c0_10] : memref<2x1024xf32, #tpu.memory_space<vmem>>, vector<2x1024xf32>
    tpu.vector_store %arg4[%c0_9, %c0_10], %23 {strides = array<i32>} : memref<2x1024xf32, #tpu.memory_space<vmem>>, vector<2x1024xf32>,
    return
  }
  func.func @transform_0(%arg0: i32) -> (i32, i32) {
    %c0_i32 = arith.constant 0 : i32
    %c0_i32_0 = arith.constant 0 : i32
    return %arg0, %c0_i32 : i32, i32
  }
  func.func @transform_1(%arg0: i32) -> (i32, i32) {
    %c0_i32 = arith.constant 0 : i32
    %c0_i32_0 = arith.constant 0 : i32
    %c0_i32_1 = arith.constant 0 : i32
    return %c0_i32, %c0_i32_0 : i32, i32
  }
  func.func @transform_2(%arg0: i32) -> (i32, i32) {
    %c0_i32 = arith.constant 0 : i32
    %c0_i32_0 = arith.constant 0 : i32
    %c0_i32_1 = arith.constant 0 : i32
    return %c0_i32, %c0_i32_0 : i32, i32
  }
  func.func @transform_3(%arg0: i32) -> (i32, i32) {
    %c0_i32 = arith.constant 0 : i32
    %c0_i32_0 = arith.constant 0 : i32
    return %arg0, %c0_i32 : i32, i32
  }
}

</mosaic_0001>

<llo_original>
// kernel: tpu_custom_call.1
$region0: #{tpu_custom_call.1}
  #allocation0 [shape = 'u32[]', space=smem, size = 0x4, offset = 0x4, fixed_abs, tag = 'smem constant byte address 0x4 - core index']
  #allocation1 [shape = 'u32[144,128]{1,0:T(1,128)}', space=vmem, size = 0x12000, scoped, tag = 'internal scratch']
  %s0 = inlined_call_operand.hbm [shape: f32[2,1024], index: 0, kind: input, shape index: {}]
  %s1 = inlined_call_operand.hbm [shape: f32[1,1024], index: 1, kind: input, shape index: {}]
  %s2 = inlined_call_operand.hbm [shape: f32[1,1024], index: 2, kind: input, shape index: {}]
  %s3 = inlined_call_operand.hbm [shape: f32[2,1024], index: 3, kind: output, shape index: {}]
  %s4 = sld [smem:[#allocation0]]
  $region34: #{tpu_custom_call.1} parent=0
    _
  %s6 = ssub.s32 1, %s4
  %s7 = scalar_select 0, %s6, %s4
  $region1: #{tpu_custom_call.1} parent=0
    #allocation2 [shape = 'u8[8192]{0}', space=vmem, size = 0x2000, scoped, tag = 'input window, operand 0, single buffered']
    #allocation3 [shape = 's32[1]{0}', space=sflag, size = 0x4, scoped, tag = 'scoped memory for tpu_custom_call.1']
    #allocation4 [shape = 's32[1]{0}', space=sflag, size = 0x4, scoped, tag = 'scoped memory for tpu_custom_call.1']
    #allocation5 [shape = 'u8[4096]{0}', space=vmem, size = 0x1000, scoped, tag = 'input window, operand 1, single buffered']
    #allocation6 [shape = 's32[1]{0}', space=sflag, size = 0x4, scoped, tag = 'scoped memory for tpu_custom_call.1']
    #allocation7 [shape = 'u8[4096]{0}', space=vmem, size = 0x1000, scoped, tag = 'input window, operand 2, single buffered']
    #allocation8 [shape = 'u8[8192]{0}', space=vmem, size = 0x2000, scoped, tag = 'output window, operand 0, single buffered']
    %8 = vsyncpa [#allocation3], 0
    %9 = vsyncpa [#allocation6], 0
    %10 = vsyncpa [#allocation4], 0
    // Predicated region
    $region2: #{tpu_custom_call.1} parent=1 // pred_check
      _
    $region3: #{tpu_custom_call.1} parent=1 // pred_check_branch
      %12 = sbr.rel (0) target = $region5
    $region4: #{tpu_custom_call.1} parent=1 // pred_region
      %s14 = ssub.s32 256, 256
      %15 = vsyncadd [#allocation3], %s14
      %s17 = sshll.u32 [#allocation2], 4
      %s18 = int_to_ptr.vmem [resolvable:$true] %s17
      %20 = dma.hbm_to_vmem [thread:$0]  %s0, 256, %s18, [#allocation3]
    $region5: #{tpu_custom_call.1} parent=1 // pred_fallthru
      _
    // Predicated region
    $region6: #{tpu_custom_call.1} parent=1 // pred_check
      _
    $region7: #{tpu_custom_call.1} parent=1 // pred_check_branch
      %22 = sbr.rel (0) target = $region9
    $region8: #{tpu_custom_call.1} parent=1 // pred_region
      %s24 = ssub.s32 128, 128
      %25 = vsyncadd [#allocation6], %s24
      %s27 = sshll.u32 [#allocation5], 4
      %s28 = int_to_ptr.vmem [resolvable:$true] %s27
      %30 = dma.hbm_to_vmem [thread:$0]  %s1, 128, %s28, [#allocation6]
    $region9: #{tpu_custom_call.1} parent=1 // pred_fallthru
      _
    // Predicated region
    $region10: #{tpu_custom_call.1} parent=1 // pred_check
      _
    $region11: #{tpu_custom_call.1} parent=1 // pred_check_branch
      %32 = sbr.rel (0) target = $region13
    $region12: #{tpu_custom_call.1} parent=1 // pred_region
      %s34 = ssub.s32 128, 128
      %35 = vsyncadd [#allocation6], %s34
      %s37 = sshll.u32 [#allocation7], 4
      %s38 = int_to_ptr.vmem [resolvable:$true] %s37
      %40 = dma.hbm_to_vmem [thread:$0]  %s2, 128, %s38, [#allocation6]
    $region13: #{tpu_custom_call.1} parent=1 // pred_fallthru
      _
    // Predicated region
    $region14: #{tpu_custom_call.1} parent=1 // pred_check
      _
    $region15: #{tpu_custom_call.1} parent=1 // pred_check_branch
      %42 = sbr.rel (0) target = $region17
    $region16: #{tpu_custom_call.1} parent=1 // pred_region
      %43 = dma.done [#allocation3], 256
    $region17: #{tpu_custom_call.1} parent=1 // pred_fallthru
      _
    // Predicated region
    $region18: #{tpu_custom_call.1} parent=1 // pred_check
      _
    $region19: #{tpu_custom_call.1} parent=1 // pred_check_branch
      %45 = sbr.rel (0) target = $region21
    $region20: #{tpu_custom_call.1} parent=1 // pred_region
      %46 = dma.done [#allocation6], 128
    $region21: #{tpu_custom_call.1} parent=1 // pred_fallthru
      _
    // Predicated region
    $region22: #{tpu_custom_call.1} parent=1 // pred_check
      _
    $region23: #{tpu_custom_call.1} parent=1 // pred_check_branch
      %48 = sbr.rel (0) target = $region25
    $region24: #{tpu_custom_call.1} parent=1 // pred_region
      %49 = dma.done [#allocation6], 128
    $region25: #{tpu_custom_call.1} parent=1 // pred_fallthru
      _
    %v50 = vld [vmem:[#allocation2] sm:$0xff]
    %v51 = vld [vmem:[#allocation2 + $0x8] sm:$0xff]
    %v54 = vcombine.high %v50, %v50
    %v56 = vunpack.c.l.s4 1983009808
    %v57 = vunpack.c.0.s8 %v56
    %v58 = vlaneseq
    %v59 = vshrl.u32 %v58, 7
    %v60 = vsub.s32 %v57, %v59
    %v61 = vrot.slane %v50, %v60
    %v63 = vunpack.c.l.s4 1983009808
    %v64 = vunpack.c.0.s8 %v63
    %v65 = vlaneseq
    %v66 = vshrl.u32 %v65, 7
    %v67 = vsub.s32 %v64, %v66
    %v68 = vrot.slane %v54, %v67
    %v69 = vcombine.high %v61, %v61
    %v70 = vcombine.high %v68, %v68
    %v71 = vcombine.high %v51, %v51
    %v73 = vunpack.c.l.s4 1983009808
    %v74 = vunpack.c.0.s8 %v73
    %v75 = vlaneseq
    %v76 = vshrl.u32 %v75, 7
    %v77 = vsub.s32 %v74, %v76
    %v78 = vrot.slane %v51, %v77
    %v80 = vunpack.c.l.s4 1983009808
    %v81 = vunpack.c.0.s8 %v80
    %v82 = vlaneseq
    %v83 = vshrl.u32 %v82, 7
    %v84 = vsub.s32 %v81, %v83
    %v85 = vrot.slane %v71, %v84
    %v86 = vcombine.high %v78, %v78
    %v87 = vcombine.high %v85, %v85
    %vm96 = vcmask 1041408
    %v97 = vsel %vm96, %v61, 0.0
    %v98 = vsel %vm96, %v69, 0.0
    %v99 = vadd.f32 %v97, %v98
    %v100 = vsel %vm96, %v68, 0.0
    %v101 = vadd.f32 %v99, %v100
    %v102 = vsel %vm96, %v70, 0.0
    %v103 = vadd.f32 %v101, %v102
    %v104 = vsel %vm96, %v78, 0.0
    %v105 = vadd.f32 %v103, %v104
    %v106 = vsel %vm96, %v86, 0.0
    %v107 = vadd.f32 %v105, %v106
    %v108 = vsel %vm96, %v85, 0.0
    %v109 = vadd.f32 %v107, %v108
    %v110 = vsel %vm96, %v87, 0.0
    %v111 = vadd.f32 %v109, %v110
    %112 = vadd.xlane.f32.xlu0 %v111
    %v113 = vpop.xlane.xlu0 %112
    %v114 = vmul.f32 %v113, 0.0009765625
    %v117 = vunpack.c.l.s4 269488144
    %v118 = vunpack.c.0.s8 %v117
    %v119 = vlaneseq
    %v120 = vshrl.u32 %v119, 7
    %v121 = vsub.s32 %v118, %v120
    %v122 = vrot.slane %v114, %v121
    %v124 = vsub.f32 %v50, %v122
    %v125 = vsub.f32 %v51, %v122
    %v126 = vmul.f32 %v124, %v124
    %v127 = vmul.f32 %v125, %v125
    %v130 = vcombine.high %v126, %v126
    %v132 = vunpack.c.l.s4 1983009808
    %v133 = vunpack.c.0.s8 %v132
    %v134 = vlaneseq
    %v135 = vshrl.u32 %v134, 7
    %v136 = vsub.s32 %v133, %v135
    %v137 = vrot.slane %v126, %v136
    %v139 = vunpack.c.l.s4 1983009808
    %v140 = vunpack.c.0.s8 %v139
    %v141 = vlaneseq
    %v142 = vshrl.u32 %v141, 7
    %v143 = vsub.s32 %v140, %v142
    %v144 = vrot.slane %v130, %v143
    %v145 = vcombine.high %v137, %v137
    %v146 = vcombine.high %v144, %v144
    %v147 = vcombine.high %v127, %v127
    %v149 = vunpack.c.l.s4 1983009808
    %v150 = vunpack.c.0.s8 %v149
    %v151 = vlaneseq
    %v152 = vshrl.u32 %v151, 7
    %v153 = vsub.s32 %v150, %v152
    %v154 = vrot.slane %v127, %v153
    %v156 = vunpack.c.l.s4 1983009808
    %v157 = vunpack.c.0.s8 %v156
    %v158 = vlaneseq
    %v159 = vshrl.u32 %v158, 7
    %v160 = vsub.s32 %v157, %v159
    %v161 = vrot.slane %v147, %v160
    %v162 = vcombine.high %v154, %v154
    %v163 = vcombine.high %v161, %v161
    %v172 = vsel %vm96, %v137, 0.0
    %v173 = vsel %vm96, %v145, 0.0
    %v174 = vadd.f32 %v172, %v173
    %v175 = vsel %vm96, %v144, 0.0
    %v176 = vadd.f32 %v174, %v175
    %v177 = vsel %vm96, %v146, 0.0
    %v178 = vadd.f32 %v176, %v177
    %v179 = vsel %vm96, %v154, 0.0
    %v180 = vadd.f32 %v178, %v179
    %v181 = vsel %vm96, %v162, 0.0
    %v182 = vadd.f32 %v180, %v181
    %v183 = vsel %vm96, %v161, 0.0
    %v184 = vadd.f32 %v182, %v183
    %v185 = vsel %vm96, %v163, 0.0
    %v186 = vadd.f32 %v184, %v185
    %187 = vadd.xlane.f32.xlu0 %v186
    %v188 = vpop.xlane.xlu0 %187
    %v189 = vmul.f32 %v188, 0.0009775171
    %v190 = vrsqrt.pop %v189
    %v191 = vmul.f32 %v189, %v190
    %vm192 = vcmp.eq.f32.partialorder %v189, inf
    %v193 = vsel %vm192, %v189, %v191
    %vm194 = vcmp.eq.f32.partialorder %v189, 0.0
    %v195 = vand.u32 %v189, 2147483648
    %v196 = vsel %vm194, %v195, %v193
    %v197 = vadd.f32 %v196, 1e-05
    %v198 = vrcp.pop %v197
    %v201 = vunpack.c.l.s4 269488144
    %v202 = vunpack.c.0.s8 %v201
    %v203 = vlaneseq
    %v204 = vshrl.u32 %v203, 7
    %v205 = vsub.s32 %v202, %v204
    %v206 = vrot.slane %v198, %v205
    %v208 = vmul.f32 %v124, %v206
    %v209 = vmul.f32 %v125, %v206
    %v210 = vld [vmem:[#allocation5] sm:$0xff]
    %v212 = vlaneseq
    %v213 = vshrl.u32 %v212, 7
    %v214 = vsub.s32 0, %v213
    %v215 = vrot.slane %v210, %v214
    %v216 = vlaneseq
    %v217 = vshrl.u32 %v216, 7
    %v218 = vsub.s32 1, %v217
    %v219 = vrot.slane %v210, %v218
    %v220 = vlaneseq
    %v221 = vshrl.u32 %v220, 7
    %v222 = vsub.s32 2, %v221
    %v223 = vrot.slane %v210, %v222
    %v224 = vlaneseq
    %v225 = vshrl.u32 %v224, 7
    %v226 = vsub.s32 3, %v225
    %v227 = vrot.slane %v210, %v226
    %v228 = vlaneseq
    %v229 = vshrl.u32 %v228, 7
    %v230 = vsub.s32 4, %v229
    %v231 = vrot.slane %v210, %v230
    %v232 = vlaneseq
    %v233 = vshrl.u32 %v232, 7
    %v234 = vsub.s32 5, %v233
    %v235 = vrot.slane %v210, %v234
    %v236 = vlaneseq
    %v237 = vshrl.u32 %v236, 7
    %v238 = vsub.s32 6, %v237
    %v239 = vrot.slane %v210, %v238
    %v240 = vlaneseq
    %v241 = vshrl.u32 %v240, 7
    %v242 = vsub.s32 7, %v241
    %v243 = vrot.slane %v210, %v242
    %v244 = vcombine.low %v215, %v219
    %v245 = vcombine.low %v223, %v227
    %v247 = vunpack.c.l.s4 1983009808
    %v248 = vunpack.c.0.s8 %v247
    %v249 = vlaneseq
    %v250 = vshrl.u32 %v249, 7
    %v251 = vsub.s32 %v248, %v250
    %v252 = vrot.slane %v244, %v251
    %v254 = vunpack.c.l.s4 1983009808
    %v255 = vunpack.c.0.s8 %v254
    %v256 = vlaneseq
    %v257 = vshrl.u32 %v256, 7
    %v258 = vsub.s32 %v255, %v257
    %v259 = vrot.slane %v245, %v258
    %v260 = vcombine.low %v252, %v259
    %v261 = vcombine.low %v231, %v235
    %v262 = vcombine.low %v239, %v243
    %v264 = vunpack.c.l.s4 1983009808
    %v265 = vunpack.c.0.s8 %v264
    %v266 = vlaneseq
    %v267 = vshrl.u32 %v266, 7
    %v268 = vsub.s32 %v265, %v267
    %v269 = vrot.slane %v261, %v268
    %v271 = vunpack.c.l.s4 1983009808
    %v272 = vunpack.c.0.s8 %v271
    %v273 = vlaneseq
    %v274 = vshrl.u32 %v273, 7
    %v275 = vsub.s32 %v272, %v274
    %v276 = vrot.slane %v262, %v275
    %v277 = vcombine.low %v269, %v276
    %v280 = vmul.f32 %v208, %v260
    %v281 = vmul.f32 %v209, %v277
    %v282 = vld [vmem:[#allocation7] sm:$0xff]
    %v284 = vlaneseq
    %v285 = vshrl.u32 %v284, 7
    %v286 = vsub.s32 0, %v285
    %v287 = vrot.slane %v282, %v286
    %v288 = vlaneseq
    %v289 = vshrl.u32 %v288, 7
    %v290 = vsub.s32 1, %v289
    %v291 = vrot.slane %v282, %v290
    %v292 = vlaneseq
    %v293 = vshrl.u32 %v292, 7
    %v294 = vsub.s32 2, %v293
    %v295 = vrot.slane %v282, %v294
    %v296 = vlaneseq
    %v297 = vshrl.u32 %v296, 7
    %v298 = vsub.s32 3, %v297
    %v299 = vrot.slane %v282, %v298
    %v300 = vlaneseq
    %v301 = vshrl.u32 %v300, 7
    %v302 = vsub.s32 4, %v301
    %v303 = vrot.slane %v282, %v302
    %v304 = vlaneseq
    %v305 = vshrl.u32 %v304, 7
    %v306 = vsub.s32 5, %v305
    %v307 = vrot.slane %v282, %v306
    %v308 = vlaneseq
    %v309 = vshrl.u32 %v308, 7
    %v310 = vsub.s32 6, %v309
    %v311 = vrot.slane %v282, %v310
    %v312 = vlaneseq
    %v313 = vshrl.u32 %v312, 7
    %v314 = vsub.s32 7, %v313
    %v315 = vrot.slane %v282, %v314
    %v316 = vcombine.low %v287, %v291
    %v317 = vcombine.low %v295, %v299
    %v319 = vunpack.c.l.s4 1983009808
    %v320 = vunpack.c.0.s8 %v319
    %v321 = vlaneseq
    %v322 = vshrl.u32 %v321, 7
    %v323 = vsub.s32 %v320, %v322
    %v324 = vrot.slane %v316, %v323
    %v326 = vunpack.c.l.s4 1983009808
    %v327 = vunpack.c.0.s8 %v326
    %v328 = vlaneseq
    %v329 = vshrl.u32 %v328, 7
    %v330 = vsub.s32 %v327, %v329
    %v331 = vrot.slane %v317, %v330
    %v332 = vcombine.low %v324, %v331
    %v333 = vcombine.low %v303, %v307
    %v334 = vcombine.low %v311, %v315
    %v336 = vunpack.c.l.s4 1983009808
    %v337 = vunpack.c.0.s8 %v336
    %v338 = vlaneseq
    %v339 = vshrl.u32 %v338, 7
    %v340 = vsub.s32 %v337, %v339
    %v341 = vrot.slane %v333, %v340
    %v343 = vunpack.c.l.s4 1983009808
    %v344 = vunpack.c.0.s8 %v343
    %v345 = vlaneseq
    %v346 = vshrl.u32 %v345, 7
    %v347 = vsub.s32 %v344, %v346
    %v348 = vrot.slane %v334, %v347
    %v349 = vcombine.low %v341, %v348
    %v352 = vadd.f32 %v280, %v332
    %v353 = vadd.f32 %v281, %v349
    %354 = vst [vmem:[#allocation8] sm:$0xff] %v352
    %355 = vst [vmem:[#allocation8 + $0x8] sm:$0xff] %v353
    // Predicated region
    $region26: #{tpu_custom_call.1} parent=1 // pred_check
      _
    $region27: #{tpu_custom_call.1} parent=1 // pred_check_branch
      %357 = sbr.rel (0) target = $region29
    $region28: #{tpu_custom_call.1} parent=1 // pred_region
      %s359 = ssub.s32 256, 256
      %360 = vsyncadd [#allocation4], %s359
      %s362 = sshll.u32 [#allocation8], 4
      %s363 = int_to_ptr.vmem [resolvable:$true] %s362
      %365 = dma.vmem_to_hbm [thread:$0]  %s363, 256, %s3, [#allocation4]
    $region29: #{tpu_custom_call.1} parent=1 // pred_fallthru
      _
    // Predicated region
    $region30: #{tpu_custom_call.1} parent=1 // pred_check
      _
    $region31: #{tpu_custom_call.1} parent=1 // pred_check_branch
      %367 = sbr.rel (0) target = $region33
    $region32: #{tpu_custom_call.1} parent=1 // pred_region
      %368 = dma.done [#allocation4], 256
    $region33: #{tpu_custom_call.1} parent=1 // pred_fallthru
      _
    %369 = vsyncpa [#allocation3], 1
    %370 = vsyncpa [#allocation6], 1
    %371 = vsyncpa [#allocation4], 1

</llo_original>
